<compile_context>
chip_gen: v7x
topology: tpu7x:2x2x1
jax: 0.10.0
libtpu: 0.0.40
codegen_flags: <defaults>
</compile_context>

<pallas_src>
import jax
import jax.numpy as jnp
from jax.experimental import pallas as pl
from jax.experimental.pallas import tpu as pltpu

LANE = 128        # lane width (last-dim vreg extent)
SUBPACK = 16      # bf16 sublane packing (rows per packed vreg)


def _round_up(x, m):
    return (x + m - 1) // m * m


def dqn_kernel(x_ref, w1_ref, b1_ref, w2_ref, b2_ref, w3_ref, b3_ref, o_ref):
    # Biases: loaded once per grid step, broadcast on idle VPU slots.
    b1 = b1_ref[...]
    b2 = b2_ref[...]
    b3 = b3_ref[...]
    # fc1 + ReLU  (bf16 operands on the MXU, f32 accumulate; K=80)
    h1 = jnp.dot(x_ref[...], w1_ref[...], preferred_element_type=jnp.float32)
    h1 = jnp.maximum(h1 + b1, 0.0)
    # fc2 + ReLU  (hidden stays 128-lane-dense, VMEM-only)
    h2 = jnp.dot(h1.astype(jnp.bfloat16), w2_ref[...],
                 preferred_element_type=jnp.float32)
    h2 = jnp.maximum(h2 + b2, 0.0)
    # out (no activation); narrow 8-lane output -> ~16x less write-back traffic
    o = jnp.dot(h2.astype(jnp.bfloat16), w3_ref[...],
                preferred_element_type=jnp.float32)
    o_ref[...] = (o + b3).astype(o_ref.dtype)


def dqn_forward(x, kernel_params, *, out_features=4, max_tile=1024):
    """x: (batch, in_features) f32; kernel_params: padded/bf16 weights (pad_params_for_kernel)."""
    w1 = kernel_params["w1"]
    b1 = kernel_params["b1"]
    w2 = kernel_params["w2"]
    b2 = kernel_params["b2"]
    w3 = kernel_params["w3"]
    b3 = kernel_params["b3"]

    batch, in_features = x.shape
    in_pad = w1.shape[0]      # e.g. 80  (round_up(68, 16), NOT 128)
    out_pad = w3.shape[1]     # 8        (narrow output slab)

    # Minimal batch pad: only to a bf16 sublane-pack multiple, never to a tile
    # multiple (the ragged last tile is handled by the cdiv grid).
    batch_pad = _round_up(batch, SUBPACK)
    # Tile: large enough to amortize per-step overhead, small enough that the
    # grid has >= 2 steps when the batch allows it (v7x megacore sharding).
    tb = min(max_tile, max(SUBPACK, _round_up(pl.cdiv(batch, 2), SUBPACK)))
    grid = (pl.cdiv(batch_pad, tb),)

    # Fused cast + minimal zero-pad (exact: zero cols x zero weight rows).
    xp = jnp.pad(x.astype(jnp.bfloat16),
                 ((0, batch_pad - batch), (0, in_pad - in_features)))

    out = pl.pallas_call(
        dqn_kernel,
        out_shape=jax.ShapeDtypeStruct((batch_pad, out_pad), jnp.float32),
        grid=grid,
        in_specs=[
            pl.BlockSpec((tb, in_pad), lambda i: (i, 0)),   # x: blocked over batch
            pl.BlockSpec(w1.shape, lambda i: (0, 0)),       # weights/biases: VMEM-resident
            pl.BlockSpec(b1.shape, lambda i: (0, 0)),
            pl.BlockSpec(w2.shape, lambda i: (0, 0)),
            pl.BlockSpec(b2.shape, lambda i: (0, 0)),
            pl.BlockSpec(w3.shape, lambda i: (0, 0)),
            pl.BlockSpec(b3.shape, lambda i: (0, 0)),
        ],
        out_specs=pl.BlockSpec((tb, out_pad), lambda i: (i, 0)),
        compiler_params=pltpu.CompilerParams(
            dimension_semantics=("parallel",)),
    )(xp, w1, b1, w2, b2, w3, b3)

    # Slice the real batch rows and the 4 real Q-value lanes back out.
    return out[:batch, :out_features]


def init_dqn_params(key, board_height, board_width, total_snake_counts):
    """PyTorch-style uniform init; weights transposed to (in, out), f32, unpadded."""
    in_features = board_width * board_height + total_snake_counts + 1
    dims = [(in_features, 24), (24, 32), (32, 4)]
    params = {}
    for i, (fan_in, fan_out) in enumerate(dims, start=1):
        key, kw, kb = jax.random.split(key, 3)
        bound = 1.0 / jnp.sqrt(jnp.float32(fan_in))
        params[f"w{i}"] = jax.random.uniform(
            kw, (fan_in, fan_out), jnp.float32, minval=-bound, maxval=bound)
        params[f"b{i}"] = jax.random.uniform(
            kb, (1, fan_out), jnp.float32, minval=-bound, maxval=bound)
    return params


def pad_params_for_kernel(params):
    """Pad widths for the kernel; cast weights to bf16 once.

    - Input width: round_up to 16 (bf16 sublane pack), NOT 128 -> minimal x DMA.
    - Hidden widths: 128 (lane-dense in VMEM only, never touch HBM).
    - Output width: 8 (narrow HBM write-back; last-dim full-extent block).
    Zero padding is numerically exact: padded input columns are zero, padded
    hidden units get bias 0 -> ReLU(0) = 0 and contribute nothing downstream;
    padded output lanes are sliced off in dqn_forward.  Biases stay f32.
    """
    w1, b1 = params["w1"], params["b1"]
    w2, b2 = params["w2"], params["b2"]
    w3, b3 = params["w3"], params["b3"]

    in_pad = _round_up(w1.shape[0], SUBPACK)   # 68 -> 80
    h1_pad = _round_up(w1.shape[1], LANE)      # 24 -> 128
    h2_pad = _round_up(w2.shape[1], LANE)      # 32 -> 128
    out_pad = _round_up(w3.shape[1], 8)        # 4  -> 8

    def pad2(a, rows, cols):
        return jnp.zeros((rows, cols), jnp.float32).at[:a.shape[0], :a.shape[1]].set(a)

    return {
        "w1": pad2(w1, in_pad, h1_pad).astype(jnp.bfloat16),
        "b1": pad2(b1, 1, h1_pad),
        "w2": pad2(w2, h1_pad, h2_pad).astype(jnp.bfloat16),
        "b2": pad2(b2, 1, h2_pad),
        "w3": pad2(w3, h2_pad, out_pad).astype(jnp.bfloat16),
        "b3": pad2(b3, 1, out_pad),
    }


def dqn_reference(x, params):
    """Pure-f32 reference (matches the PyTorch module semantics)."""
    h1 = jnp.maximum(x @ params["w1"] + params["b1"], 0.0)
    h2 = jnp.maximum(h1 @ params["w2"] + params["b2"], 0.0)
    return h2 @ params["w3"] + params["b3"]


def dqn_reference_bf16(x, params):
    """Reference mirroring the kernel's bf16-operand / f32-accumulate matmuls."""
    def mm(a, w):
        return jnp.dot(a.astype(jnp.bfloat16), w.astype(jnp.bfloat16),
                       preferred_element_type=jnp.float32)
    h1 = jnp.maximum(mm(x, params["w1"]) + params["b1"], 0.0)
    h2 = jnp.maximum(mm(h1, params["w2"]) + params["b2"], 0.0)
    return mm(h2, params["w3"]) + params["b3"]


if __name__ == "__main__":
    board_height, board_width, total_snake_counts = 8, 8, 3
    in_features = board_width * board_height + total_snake_counts + 1  # 68
    batch = 2

    key = jax.random.PRNGKey(0)
    key, kx = jax.random.split(key)
    x = jax.random.normal(kx, (batch, in_features), jnp.float32)
    params = init_dqn_params(key, board_height, board_width, total_snake_counts)
    kernel_params = pad_params_for_kernel(params)

    out = jax.block_until_ready(dqn_forward(x, kernel_params))
    ref_bf16 = jax.block_until_ready(dqn_reference_bf16(x, params))
    ref_f32 = jax.block_until_ready(dqn_reference(x, params))

    assert out.shape == (batch, 4), out.shape
    # Exact-ish check against a reference using the same bf16-operand MXU math.
    assert jnp.allclose(out, ref_bf16, atol=1e-3, rtol=1e-3), (out, ref_bf16)
    # Loose check against pure-f32 math (bf16 operand rounding only).
    assert jnp.allclose(out, ref_f32, atol=1e-1, rtol=1e-1), (out, ref_f32)
    print("KERNEL_OK")
</pallas_src>

<mosaic_0001>
module attributes {stable_mosaic.version = 11 : i64} {
  func.func @dqn_kernel(%arg0: i32, %arg1: memref<16x80xbf16, #tpu.memory_space<vmem>>, %arg2: memref<80x128xbf16, #tpu.memory_space<vmem>>, %arg3: memref<1x128xf32, #tpu.memory_space<vmem>>, %arg4: memref<128x128xbf16, #tpu.memory_space<vmem>>, %arg5: memref<1x128xf32, #tpu.memory_space<vmem>>, %arg6: memref<128x8xbf16, #tpu.memory_space<vmem>>, %arg7: memref<1x8xf32, #tpu.memory_space<vmem>>, %arg8: memref<16x8xf32, #tpu.memory_space<vmem>>) attributes {dimension_semantics = [#tpu.dimension_semantics<parallel>], iteration_bounds = array<i64: 1>, scalar_prefetch = 0 : i64, scratch_operands = 0 : i64, tpu.core_type = #tpu.core_type<tc>, window_params = [{transform_indices = @transform_0, window_bounds = array<i64: 16, 80>}, {pipeline_mode = #tpu.pipeline_mode<synchronous>, transform_indices = @transform_1, window_bounds = array<i64: 80, 128>}, {pipeline_mode = #tpu.pipeline_mode<synchronous>, transform_indices = @transform_2, window_bounds = array<i64: 1, 128>}, {pipeline_mode = #tpu.pipeline_mode<synchronous>, transform_indices = @transform_3, window_bounds = array<i64: 128, 128>}, {pipeline_mode = #tpu.pipeline_mode<synchronous>, transform_indices = @transform_4, window_bounds = array<i64: 1, 128>}, {pipeline_mode = #tpu.pipeline_mode<synchronous>, transform_indices = @transform_5, window_bounds = array<i64: 128, 8>}, {pipeline_mode = #tpu.pipeline_mode<synchronous>, transform_indices = @transform_6, window_bounds = array<i64: 1, 8>}, {transform_indices = @transform_7, window_bounds = array<i64: 16, 8>}]} {
    %c0 = arith.constant 0 : index
    %c0_0 = arith.constant 0 : index
    %0 = vector.load %arg3[%c0, %c0_0] : memref<1x128xf32, #tpu.memory_space<vmem>>, vector<1x128xf32>
    %c0_1 = arith.constant 0 : index
    %c0_2 = arith.constant 0 : index
    %1 = vector.load %arg5[%c0_1, %c0_2] : memref<1x128xf32, #tpu.memory_space<vmem>>, vector<1x128xf32>
    %c0_3 = arith.constant 0 : index
    %c0_4 = arith.constant 0 : index
    %2 = vector.load %arg7[%c0_3, %c0_4] : memref<1x8xf32, #tpu.memory_space<vmem>>, vector<1x8xf32>
    %c0_5 = arith.constant 0 : index
    %c0_6 = arith.constant 0 : index
    %3 = vector.load %arg1[%c0_5, %c0_6] : memref<16x80xbf16, #tpu.memory_space<vmem>>, vector<16x80xbf16>
    %c0_7 = arith.constant 0 : index
    %c0_8 = arith.constant 0 : index
    %4 = vector.load %arg2[%c0_7, %c0_8] : memref<80x128xbf16, #tpu.memory_space<vmem>>, vector<80x128xbf16>
    %cst = arith.constant dense<0.000000e+00> : vector<16x128xf32>
    %5 = tpu.matmul %3, %4, %cst {dimension_numbers = #tpu.dot_dimension_numbers<[1], [0], [0], [1], [0, 0, 1, 1], [], []>} : vector<16x80xbf16>, vector<80x128xbf16>, vector<16x128xf32> -> vector<16x128xf32>
    %6 = vector.broadcast %0 : vector<1x128xf32> to vector<16x128xf32>
    %7 = arith.addf %5, %6 : vector<16x128xf32>
    %cst_9 = arith.constant 0.000000e+00 : f32
    %8 = vector.broadcast %cst_9 : f32 to vector<16x128xf32>
    %9 = arith.maximumf %7, %8 : vector<16x128xf32>
    %10 = arith.truncf %9 : vector<16x128xf32> to vector<16x128xbf16>
    %c0_10 = arith.constant 0 : index
    %c0_11 = arith.constant 0 : index
    %11 = vector.load %arg4[%c0_10, %c0_11] : memref<128x128xbf16, #tpu.memory_space<vmem>>, vector<128x128xbf16>
    %cst_12 = arith.constant dense<0.000000e+00> : vector<16x128xf32>
    %12 = tpu.matmul %10, %11, %cst_12 {dimension_numbers = #tpu.dot_dimension_numbers<[1], [0], [0], [1], [0, 0, 1, 1], [], []>} : vector<16x128xbf16>, vector<128x128xbf16>, vector<16x128xf32> -> vector<16x128xf32>
    %13 = vector.broadcast %1 : vector<1x128xf32> to vector<16x128xf32>
    %14 = arith.addf %12, %13 : vector<16x128xf32>
    %cst_13 = arith.constant 0.000000e+00 : f32
    %15 = vector.broadcast %cst_13 : f32 to vector<16x128xf32>
    %16 = arith.maximumf %14, %15 : vector<16x128xf32>
    %17 = arith.truncf %16 : vector<16x128xf32> to vector<16x128xbf16>
    %c0_14 = arith.constant 0 : index
    %c0_15 = arith.constant 0 : index
    %18 = vector.load %arg6[%c0_14, %c0_15] : memref<128x8xbf16, #tpu.memory_space<vmem>>, vector<128x8xbf16>
    %cst_16 = arith.constant dense<0.000000e+00> : vector<16x8xf32>
    %19 = tpu.matmul %17, %18, %cst_16 {dimension_numbers = #tpu.dot_dimension_numbers<[1], [0], [0], [1], [0, 0, 1, 1], [], []>} : vector<16x128xbf16>, vector<128x8xbf16>, vector<16x8xf32> -> vector<16x8xf32>
    %20 = vector.broadcast %2 : vector<1x8xf32> to vector<16x8xf32>
    %21 = arith.addf %19, %20 : vector<16x8xf32>
    %c0_17 = arith.constant 0 : index
    %c0_18 = arith.constant 0 : index
    %22 = vector.load %arg8[%c0_17, %c0_18] : memref<16x8xf32, #tpu.memory_space<vmem>>, vector<16x8xf32>
    tpu.vector_store %arg8[%c0_17, %c0_18], %21 {strides = array<i32>} : memref<16x8xf32, #tpu.memory_space<vmem>>, vector<16x8xf32>,
    return
  }
  func.func @transform_0(%arg0: i32) -> (i32, i32) {
    %c0_i32 = arith.constant 0 : i32
    %c0_i32_0 = arith.constant 0 : i32
    return %arg0, %c0_i32 : i32, i32
  }
  func.func @transform_1(%arg0: i32) -> (i32, i32) {
    %c0_i32 = arith.constant 0 : i32
    %c0_i32_0 = arith.constant 0 : i32
    %c0_i32_1 = arith.constant 0 : i32
    return %c0_i32, %c0_i32_0 : i32, i32
  }
  func.func @transform_2(%arg0: i32) -> (i32, i32) {
    %c0_i32 = arith.constant 0 : i32
    %c0_i32_0 = arith.constant 0 : i32
    %c0_i32_1 = arith.constant 0 : i32
    return %c0_i32, %c0_i32_0 : i32, i32
  }
  func.func @transform_3(%arg0: i32) -> (i32, i32) {
    %c0_i32 = arith.constant 0 : i32
    %c0_i32_0 = arith.constant 0 : i32
    %c0_i32_1 = arith.constant 0 : i32
    return %c0_i32, %c0_i32_0 : i32, i32
  }
  func.func @transform_4(%arg0: i32) -> (i32, i32) {
    %c0_i32 = arith.constant 0 : i32
    %c0_i32_0 = arith.constant 0 : i32
    %c0_i32_1 = arith.constant 0 : i32
    return %c0_i32, %c0_i32_0 : i32, i32
  }
  func.func @transform_5(%arg0: i32) -> (i32, i32) {
    %c0_i32 = arith.constant 0 : i32
    %c0_i32_0 = arith.constant 0 : i32
    %c0_i32_1 = arith.constant 0 : i32
    return %c0_i32, %c0_i32_0 : i32, i32
  }
  func.func @transform_6(%arg0: i32) -> (i32, i32) {
    %c0_i32 = arith.constant 0 : i32
    %c0_i32_0 = arith.constant 0 : i32
    %c0_i32_1 = arith.constant 0 : i32
    return %c0_i32, %c0_i32_0 : i32, i32
  }
  func.func @transform_7(%arg0: i32) -> (i32, i32) {
    %c0_i32 = arith.constant 0 : i32
    %c0_i32_0 = arith.constant 0 : i32
    return %arg0, %c0_i32 : i32, i32
  }
}

</mosaic_0001>

<llo_original>
// kernel: tpu_custom_call.1
$region0: #{tpu_custom_call.1}
  #allocation0 [shape = 'u32[]', space=smem, size = 0x4, offset = 0x4, fixed_abs, tag = 'smem constant byte address 0x4 - core index']
  #allocation1 [shape = 'u32[144,128]{1,0:T(1,128)}', space=vmem, size = 0x12000, scoped, tag = 'internal scratch']
  %s0 = inlined_call_operand.vmem [shape: bf16[16,80], index: 0, kind: input, shape index: {}]
  %s1 = inlined_call_operand.hbm [shape: bf16[80,128], index: 1, kind: input, shape index: {}]
  %s2 = inlined_call_operand.vmem [shape: f32[1,128], index: 2, kind: input, shape index: {}]
  %s3 = inlined_call_operand.vmem [shape: bf16[128,128], index: 3, kind: input, shape index: {}]
  %s4 = inlined_call_operand.vmem [shape: f32[1,128], index: 4, kind: input, shape index: {}]
  %s5 = inlined_call_operand.vmem [shape: bf16[128,8], index: 5, kind: input, shape index: {}]
  %s6 = inlined_call_operand.vmem [shape: f32[1,8], index: 6, kind: input, shape index: {}]
  %s7 = inlined_call_operand.vmem [shape: f32[16,8], index: 7, kind: output, shape index: {}]
  %s8 = sld [smem:[#allocation0]]
  $region42: #{tpu_custom_call.1} parent=0
    _
  %s10 = ssub.s32 1, %s8
  %s11 = scalar_select 0, %s10, %s8
  $region1: #{tpu_custom_call.1} parent=0
    #allocation2 [shape = 'u8[20480]{0}', space=vmem, size = 0x5000, scoped, tag = 'input window, operand 1, single buffered']
    #allocation3 [shape = 's32[1]{0}', space=sflag, size = 0x4, scoped, tag = 'scoped memory for tpu_custom_call.1']
    %12 = vsyncpa [#allocation3], 0
    // Predicated region
    $region2: #{tpu_custom_call.1} parent=1 // pred_check
      _
    $region3: #{tpu_custom_call.1} parent=1 // pred_check_branch
      %14 = sbr.rel (0) target = $region5
    $region4: #{tpu_custom_call.1} parent=1 // pred_region
      _
    $region5: #{tpu_custom_call.1} parent=1 // pred_fallthru
      _
    // Predicated region
    $region6: #{tpu_custom_call.1} parent=1 // pred_check
      _
    $region7: #{tpu_custom_call.1} parent=1 // pred_check_branch
      %16 = sbr.rel (0) target = $region9
    $region8: #{tpu_custom_call.1} parent=1 // pred_region
      %s18 = ssub.s32 640, 640
      %19 = vsyncadd [#allocation3], %s18
      %s20 = sshll.u32 [#allocation2], 4
      %s21 = int_to_ptr.vmem [resolvable:$true] %s20
      %26 = dma.hbm_to_vmem [thread:$0]  %s1, 640, %s21, [#allocation3], 64, 64, 4
    $region9: #{tpu_custom_call.1} parent=1 // pred_fallthru
      _
    // Predicated region
    $region10: #{tpu_custom_call.1} parent=1 // pred_check
      _
    $region11: #{tpu_custom_call.1} parent=1 // pred_check_branch
      %28 = sbr.rel (0) target = $region13
    $region12: #{tpu_custom_call.1} parent=1 // pred_region
      _
    $region13: #{tpu_custom_call.1} parent=1 // pred_fallthru
      _
    // Predicated region
    $region14: #{tpu_custom_call.1} parent=1 // pred_check
      _
    $region15: #{tpu_custom_call.1} parent=1 // pred_check_branch
      %30 = sbr.rel (0) target = $region17
    $region16: #{tpu_custom_call.1} parent=1 // pred_region
      _
    $region17: #{tpu_custom_call.1} parent=1 // pred_fallthru
      _
    // Predicated region
    $region18: #{tpu_custom_call.1} parent=1 // pred_check
      _
    $region19: #{tpu_custom_call.1} parent=1 // pred_check_branch
      %32 = sbr.rel (0) target = $region21
    $region20: #{tpu_custom_call.1} parent=1 // pred_region
      _
    $region21: #{tpu_custom_call.1} parent=1 // pred_fallthru
      _
    // Predicated region
    $region22: #{tpu_custom_call.1} parent=1 // pred_check
      _
    $region23: #{tpu_custom_call.1} parent=1 // pred_check_branch
      %34 = sbr.rel (0) target = $region25
    $region24: #{tpu_custom_call.1} parent=1 // pred_region
      _
    $region25: #{tpu_custom_call.1} parent=1 // pred_fallthru
      _
    // Predicated region
    $region26: #{tpu_custom_call.1} parent=1 // pred_check
      _
    $region27: #{tpu_custom_call.1} parent=1 // pred_check_branch
      %36 = sbr.rel (0) target = $region29
    $region28: #{tpu_custom_call.1} parent=1 // pred_region
      _
    $region29: #{tpu_custom_call.1} parent=1 // pred_fallthru
      _
    // Predicated region
    $region30: #{tpu_custom_call.1} parent=1 // pred_check
      _
    $region31: #{tpu_custom_call.1} parent=1 // pred_check_branch
      %38 = sbr.rel (0) target = $region33
    $region32: #{tpu_custom_call.1} parent=1 // pred_region
      %39 = dma.done [#allocation3], 640
    $region33: #{tpu_custom_call.1} parent=1 // pred_fallthru
      _
    %v41 = vld [vmem:[%s2] sm:$0x1]
    %v42 = vld [vmem:[%s4] sm:$0x1]
    %v43 = vld [vmem:[%s6] sm:$0x1]
    %v44 = vld [vmem:[%s0] sm:$0xf]
    %v45 = vld [vmem:[%s0 + $0x4] sm:$0xf]
    %v46 = vld [vmem:[#allocation2] sm:$0xf]
    %v47 = vld [vmem:[#allocation2 + $0x4] sm:$0xf]
    %v48 = vld [vmem:[#allocation2 + $0x8] sm:$0xf]
    %v49 = vld [vmem:[#allocation2 + $0xc] sm:$0xf]
    %v50 = vld [vmem:[#allocation2 + $0x10] sm:$0xf]
    %v51 = vld [vmem:[#allocation2 + $0x14] sm:$0xf]
    %v52 = vld [vmem:[#allocation2 + $0x18] sm:$0xf]
    %v53 = vld [vmem:[#allocation2 + $0x1c] sm:$0xf]
    %v54 = vld [vmem:[#allocation2 + $0x20] sm:$0xf]
    %v55 = vld [vmem:[#allocation2 + $0x24] sm:$0xf]
    %v57 = vlaneseq
    %v58 = vshrl.u32 %v57, 7
    %v59 = vsub.s32 0, %v58
    %v60 = vrot.slane %v41, %v59
    %v64 = vunpack.c.l.b16 %v44
    %v65 = vunpack.c.l.b16 %v45
    %v66 = vpack.c.b16 %v65, %v64
    %v77 = vunpack.c.l.b16 %v46
    %v78 = vunpack.c.l.b16 %v47
    %v79 = vunpack.c.l.b16 %v48
    %v80 = vunpack.c.l.b16 %v49
    %v81 = vunpack.c.l.b16 %v50
    %v82 = vunpack.c.l.b16 %v51
    %v83 = vunpack.c.l.b16 %v52
    %v84 = vunpack.c.l.b16 %v53
    %v85 = vunpack.c.l.b16 %v54
    %v86 = vunpack.c.l.b16 %v55
    %v87 = vpack.c.b16 %v78, %v77
    %v88 = vpack.c.b16 %v80, %v79
    %v89 = vpack.c.b16 %v82, %v81
    %v90 = vpack.c.b16 %v84, %v83
    %v91 = vpack.c.b16 %v86, %v85
    %vm97 = vcmask 654336
    %v99 = vsel %vm97, %v66, 0
    %101 = vmatprep.subr.bf16.mxu0 0
    %102 = vmatpush1.bf16.msra.mxu0 %v87
    %103 = vmatprep.subr.bf16.mxu0 0
    %104 = vmatpush1.bf16.msra.mxu0 %v88
    %105 = vmatprep.subr.bf16.mxu0 0
    %106 = vmatpush1.bf16.msra.mxu0 %v89
    %107 = vmatprep.subr.bf16.mxu0 0
    %108 = vmatpush1.bf16.msra.mxu0 %v90
    %109 = vmatprep.subr.bf16.mxu0 0
    %110 = vmatpush1.bf16.msra.mxu0 %v91
    %111 = vmatprep.subr.bf16.mxu0 0
    %112 = vmatpush1.bf16.msra.mxu0 0
    %113 = vmatprep.subr.bf16.mxu0 0
    %114 = vmatpush1.bf16.msra.mxu0 0
    %115 = vmatprep.subr.bf16.mxu0 0
    %116 = vmatpush1.bf16.msra.mxu0 0
    %117 = vmatprep.subr.bf16.mxu0 0
    %118 = vmatpush1.bf16.msra.mxu0 0
    %119 = vmatprep.subr.bf16.mxu0 0
    %120 = vmatpush1.bf16.msra.mxu0 0
    %121 = vmatprep.subr.bf16.mxu0 0
    %122 = vmatpush1.bf16.msra.mxu0 0
    %123 = vmatprep.subr.bf16.mxu0 0
    %124 = vmatpush1.bf16.msra.mxu0 0
    %125 = vmatprep.subr.bf16.mxu0 0
    %126 = vmatpush1.bf16.msra.mxu0 0
    %127 = vmatprep.subr.bf16.mxu0 0
    %128 = vmatpush1.bf16.msra.mxu0 0
    %129 = vmatprep.subr.bf16.mxu0 0
    %130 = vmatpush1.bf16.msra.mxu0 0
    %131 = vmatprep.subr.bf16.mxu0 0
    %132 = vmatpush1.bf16.msra.mxu0 0
    %133 = vmatprep.mubr.bf16.mxu0 0
    %134 = vmatmul.mubr.bf16.gmra.mrb[0].mxu0 %v99
    %v135 = vpop.f32.mrb[0].mxu0
    %v136 = vadd.f32 %v60, %v135
    %v137 = vpop.f32.mrb[0].mxu0
    %v138 = vpop.f32.mrb[0].mxu0
    %v139 = vadd.f32 %v60, %v138
    %v140 = vpop.f32.mrb[0].mxu0
    %141 = vdwg.mxu0
    %v142 = vmax.f32 %v136, 0.0
    %v143 = vmax.f32 %v139, 0.0
    %v144 = vpack.c.bf16 %v143, %v142
    %v145 = vld [vmem:[%s3] sm:$0xf]
    %v146 = vld [vmem:[%s3 + $0x4] sm:$0xf]
    %v147 = vld [vmem:[%s3 + $0x8] sm:$0xf]
    %v148 = vld [vmem:[%s3 + $0xc] sm:$0xf]
    %v149 = vld [vmem:[%s3 + $0x10] sm:$0xf]
    %v150 = vld [vmem:[%s3 + $0x14] sm:$0xf]
    %v151 = vld [vmem:[%s3 + $0x18] sm:$0xf]
    %v152 = vld [vmem:[%s3 + $0x1c] sm:$0xf]
    %v153 = vld [vmem:[%s3 + $0x20] sm:$0xf]
    %v154 = vld [vmem:[%s3 + $0x24] sm:$0xf]
    %v155 = vld [vmem:[%s3 + $0x28] sm:$0xf]
    %v156 = vld [vmem:[%s3 + $0x2c] sm:$0xf]
    %v157 = vld [vmem:[%s3 + $0x30] sm:$0xf]
    %v158 = vld [vmem:[%s3 + $0x34] sm:$0xf]
    %v159 = vld [vmem:[%s3 + $0x38] sm:$0xf]
    %v160 = vld [vmem:[%s3 + $0x3c] sm:$0xf]
    %v162 = vlaneseq
    %v163 = vshrl.u32 %v162, 7
    %v164 = vsub.s32 0, %v163
    %v165 = vrot.slane %v42, %v164
    %v183 = vunpack.c.l.b16 %v145
    %v184 = vunpack.c.l.b16 %v146
    %v185 = vunpack.c.l.b16 %v147
    %v186 = vunpack.c.l.b16 %v148
    %v187 = vunpack.c.l.b16 %v149
    %v188 = vunpack.c.l.b16 %v150
    %v189 = vunpack.c.l.b16 %v151
    %v190 = vunpack.c.l.b16 %v152
    %v191 = vunpack.c.l.b16 %v153
    %v192 = vunpack.c.l.b16 %v154
    %v193 = vunpack.c.l.b16 %v155
    %v194 = vunpack.c.l.b16 %v156
    %v195 = vunpack.c.l.b16 %v157
    %v196 = vunpack.c.l.b16 %v158
    %v197 = vunpack.c.l.b16 %v159
    %v198 = vunpack.c.l.b16 %v160
    %v199 = vpack.c.b16 %v184, %v183
    %v200 = vpack.c.b16 %v186, %v185
    %v201 = vpack.c.b16 %v188, %v187
    %v202 = vpack.c.b16 %v190, %v189
    %v203 = vpack.c.b16 %v192, %v191
    %v204 = vpack.c.b16 %v194, %v193
    %v205 = vpack.c.b16 %v196, %v195
    %v206 = vpack.c.b16 %v198, %v197
    %215 = vmatprep.subr.bf16.mxu0 0
    %216 = vmatpush1.bf16.msra.mxu0 %v199
    %217 = vmatprep.subr.bf16.mxu0 0
    %218 = vmatpush1.bf16.msra.mxu0 %v200
    %219 = vmatprep.subr.bf16.mxu0 0
    %220 = vmatpush1.bf16.msra.mxu0 %v201
    %221 = vmatprep.subr.bf16.mxu0 0
    %222 = vmatpush1.bf16.msra.mxu0 %v202
    %223 = vmatprep.subr.bf16.mxu0 0
    %224 = vmatpush1.bf16.msra.mxu0 %v203
    %225 = vmatprep.subr.bf16.mxu0 0
    %226 = vmatpush1.bf16.msra.mxu0 %v204
    %227 = vmatprep.subr.bf16.mxu0 0
    %228 = vmatpush1.bf16.msra.mxu0 %v205
    %229 = vmatprep.subr.bf16.mxu0 0
    %230 = vmatpush1.bf16.msra.mxu0 %v206
    %231 = vmatprep.subr.bf16.mxu0 0
    %232 = vmatpush1.bf16.msra.mxu0 0
    %233 = vmatprep.subr.bf16.mxu0 0
    %234 = vmatpush1.bf16.msra.mxu0 0
    %235 = vmatprep.subr.bf16.mxu0 0
    %236 = vmatpush1.bf16.msra.mxu0 0
    %237 = vmatprep.subr.bf16.mxu0 0
    %238 = vmatpush1.bf16.msra.mxu0 0
    %239 = vmatprep.subr.bf16.mxu0 0
    %240 = vmatpush1.bf16.msra.mxu0 0
    %241 = vmatprep.subr.bf16.mxu0 0
    %242 = vmatpush1.bf16.msra.mxu0 0
    %243 = vmatprep.subr.bf16.mxu0 0
    %244 = vmatpush1.bf16.msra.mxu0 0
    %245 = vmatprep.subr.bf16.mxu0 0
    %246 = vmatpush1.bf16.msra.mxu0 0
    %247 = vmatprep.mubr.bf16.mxu0 0
    %248 = vmatmul.mubr.bf16.gmra.mrb[0].mxu0 %v144
    %v249 = vpop.f32.mrb[0].mxu0
    %v250 = vadd.f32 %v165, %v249
    %v251 = vpop.f32.mrb[0].mxu0
    %v252 = vpop.f32.mrb[0].mxu0
    %v253 = vadd.f32 %v165, %v252
    %v254 = vpop.f32.mrb[0].mxu0
    %255 = vdwg.mxu0
    %v256 = vmax.f32 %v250, 0.0
    %v257 = vmax.f32 %v253, 0.0
    %v258 = vpack.c.bf16 %v257, %v256
    %v259 = vld [vmem:[%s5] sm:$0xf]
    %v260 = vld [vmem:[%s5 + $0x4] sm:$0xf]
    %v261 = vld [vmem:[%s5 + $0x8] sm:$0xf]
    %v262 = vld [vmem:[%s5 + $0xc] sm:$0xf]
    %v263 = vld [vmem:[%s5 + $0x10] sm:$0xf]
    %v264 = vld [vmem:[%s5 + $0x14] sm:$0xf]
    %v265 = vld [vmem:[%s5 + $0x18] sm:$0xf]
    %v266 = vld [vmem:[%s5 + $0x1c] sm:$0xf]
    %v267 = vld [vmem:[%s5 + $0x20] sm:$0xf]
    %v268 = vld [vmem:[%s5 + $0x24] sm:$0xf]
    %v269 = vld [vmem:[%s5 + $0x28] sm:$0xf]
    %v270 = vld [vmem:[%s5 + $0x2c] sm:$0xf]
    %v271 = vld [vmem:[%s5 + $0x30] sm:$0xf]
    %v272 = vld [vmem:[%s5 + $0x34] sm:$0xf]
    %v273 = vld [vmem:[%s5 + $0x38] sm:$0xf]
    %v274 = vld [vmem:[%s5 + $0x3c] sm:$0xf]
    %v276 = vlaneseq
    %v277 = vshrl.u32 %v276, 7
    %v278 = vsub.s32 0, %v277
    %v279 = vrot.slane %v43, %v278
    %v297 = vunpack.c.l.b16 %v259
    %v298 = vunpack.c.l.b16 %v260
    %v299 = vunpack.c.l.b16 %v261
    %v300 = vunpack.c.l.b16 %v262
    %v301 = vunpack.c.l.b16 %v263
    %v302 = vunpack.c.l.b16 %v264
    %v303 = vunpack.c.l.b16 %v265
    %v304 = vunpack.c.l.b16 %v266
    %v305 = vunpack.c.l.b16 %v267
    %v306 = vunpack.c.l.b16 %v268
    %v307 = vunpack.c.l.b16 %v269
    %v308 = vunpack.c.l.b16 %v270
    %v309 = vunpack.c.l.b16 %v271
    %v310 = vunpack.c.l.b16 %v272
    %v311 = vunpack.c.l.b16 %v273
    %v312 = vunpack.c.l.b16 %v274
    %v313 = vpack.c.b16 %v298, %v297
    %v314 = vpack.c.b16 %v300, %v299
    %v315 = vpack.c.b16 %v302, %v301
    %v316 = vpack.c.b16 %v304, %v303
    %v317 = vpack.c.b16 %v306, %v305
    %v318 = vpack.c.b16 %v308, %v307
    %v319 = vpack.c.b16 %v310, %v309
    %v320 = vpack.c.b16 %v312, %v311
    %329 = vmatprep.subr.bf16.mxu0 0
    %330 = vmatpush1.bf16.msra.mxu0 %v313
    %331 = vmatprep.subr.bf16.mxu0 0
    %332 = vmatpush1.bf16.msra.mxu0 %v314
    %333 = vmatprep.subr.bf16.mxu0 0
    %334 = vmatpush1.bf16.msra.mxu0 %v315
    %335 = vmatprep.subr.bf16.mxu0 0
    %336 = vmatpush1.bf16.msra.mxu0 %v316
    %337 = vmatprep.subr.bf16.mxu0 0
    %338 = vmatpush1.bf16.msra.mxu0 %v317
    %339 = vmatprep.subr.bf16.mxu0 0
    %340 = vmatpush1.bf16.msra.mxu0 %v318
    %341 = vmatprep.subr.bf16.mxu0 0
    %342 = vmatpush1.bf16.msra.mxu0 %v319
    %343 = vmatprep.subr.bf16.mxu0 0
    %344 = vmatpush1.bf16.msra.mxu0 %v320
    %345 = vmatprep.subr.bf16.mxu0 0
    %346 = vmatpush1.bf16.msra.mxu0 0
    %347 = vmatprep.subr.bf16.mxu0 0
    %348 = vmatpush1.bf16.msra.mxu0 0
    %349 = vmatprep.subr.bf16.mxu0 0
    %350 = vmatpush1.bf16.msra.mxu0 0
    %351 = vmatprep.subr.bf16.mxu0 0
    %352 = vmatpush1.bf16.msra.mxu0 0
    %353 = vmatprep.subr.bf16.mxu0 0
    %354 = vmatpush1.bf16.msra.mxu0 0
    %355 = vmatprep.subr.bf16.mxu0 0
    %356 = vmatpush1.bf16.msra.mxu0 0
    %357 = vmatprep.subr.bf16.mxu0 0
    %358 = vmatpush1.bf16.msra.mxu0 0
    %359 = vmatprep.subr.bf16.mxu0 0
    %360 = vmatpush1.bf16.msra.mxu0 0
    %361 = vmatprep.mubr.bf16.mxu0 0
    %362 = vmatmul.mubr.bf16.gmra.mrb[0].mxu0 %v258
    %v363 = vpop.f32.mrb[0].mxu0
    %v364 = vadd.f32 %v279, %v363
    %v365 = vpop.f32.mrb[0].mxu0
    %v366 = vpop.f32.mrb[0].mxu0
    %v367 = vadd.f32 %v279, %v366
    %v368 = vpop.f32.mrb[0].mxu0
    %369 = vdwg.mxu0
    %vm370 = vcmask 64512
    %371 = vst.msk [vmem:[%s7] sm:$0xff] %vm370, %v364
    %372 = vst.msk [vmem:[%s7 + $0x8] sm:$0xff] %vm370, %v367
    // Predicated region
    $region34: #{tpu_custom_call.1} parent=1 // pred_check
      _
    $region35: #{tpu_custom_call.1} parent=1 // pred_check_branch
      %374 = sbr.rel (0) target = $region37
    $region36: #{tpu_custom_call.1} parent=1 // pred_region
      _
    $region37: #{tpu_custom_call.1} parent=1 // pred_fallthru
      _
    // Predicated region
    $region38: #{tpu_custom_call.1} parent=1 // pred_check
      _
    $region39: #{tpu_custom_call.1} parent=1 // pred_check_branch
      %376 = sbr.rel (0) target = $region41
    $region40: #{tpu_custom_call.1} parent=1 // pred_region
      _
    $region41: #{tpu_custom_call.1} parent=1 // pred_fallthru
      _
    %377 = vsyncpa [#allocation3], 1

</llo_original>
